<compile_context>
chip_gen: v6e
topology: v6e:2x2x1
jax: 0.10.0
libtpu: 0.0.40
codegen_flags: <defaults>
</compile_context>

<pallas_src>
import math
import jax
import jax.numpy as jnp
from jax import lax
from jax.experimental import pallas as pl
from jax.experimental.pallas import tpu as pltpu

B = 2
N = 256            # small-shape stand-in for 128**2 points
K = 4
KP1 = K + 1
COLOUR_DIM = 8
FEATURE_DIM = 16
ENC_DIM = 16
HID = 32
NPIX = 256         # small-shape stand-in for res*res rays

# heads fused input slab (channel-first, bf16): rows 0:16 enc | 16:19 pcd2 | 19:24 zero pad
IN_ROWS = 24
PCD_OFF = ENC_DIM

# heads output slab layout (f32): rows 0:8 colour | 8:24 feature
SLAB_ROWS = COLOUR_DIM + FEATURE_DIM      # 24 (multiple of 8 sublanes)
COLOUR_OFF = 0
FEAT_OFF = COLOUR_DIM
L2_OUT = SLAB_ROWS

# packed bias slab layout (rows of a (128, 1) f32 array)
B1_OFF = 0                           # 64  (colour l1 | feature l1)
B2_OFF = 64                          # 24  (colour l2 | feature l2)
B1H_OFF = 88                         # 32  (bg_rob_obj l1)
B2H_OFF = 120                        # 2   (bg_rob_obj l2)
BIAS_ROWS = 128

# TODO(synk): log_sigma is a learnable nn.Parameter in the original; frozen at its
# init value exp(log_sigma) = 1 / (K * ln 2).
SIGMA_VAL = 1.0 / (K * math.log(2.0))

VMEM_LIMIT = 32 * 1024 * 1024        # safe scoped budget on v5e/v6e/v7x


def _pick_tile(n, cap=8192):
    """Largest lane tile (multiple of 128, <= cap) that divides n; else full n."""
    for t in (8192, 4096, 2048, 1024, 512, 256, 128):
        if t <= cap and t <= n and n % t == 0:
            return t
    return n


# ------------------------------------------------------------------ heads ----
def heads_kernel(x_ref, w1_ref, w2_ref, w1h_ref, w2h_ref, bias_ref,
                 cf_ref, prob_ref):
    x = x_ref[0]                      # (IN_ROWS, TN) bf16: enc | pcd2 | pad
    bias = bias_ref[...]              # (128, 1) f32

    b1 = bias[B1_OFF:B1_OFF + 2 * HID]            # (64, 1)
    b2 = bias[B2_OFF:B2_OFF + L2_OUT]             # (24, 1)
    b1h = bias[B1H_OFF:B1H_OFF + HID]             # (32, 1)
    b2h = bias[B2H_OFF:B2H_OFF + 2]               # (2, 1)

    # fused layer 1 of colour_head + feature_head (position_net folded into the
    # pcd2 columns of w1): rows 0:32 -> colour l1, rows 32:64 -> feature l1
    h1 = jnp.maximum(
        jnp.dot(w1_ref[...], x, preferred_element_type=jnp.float32) + b1, 0.0)   # (64, TN)

    # fused (block-diagonal) layer 2: rows 0:8 = colour, rows 8:24 = feature
    # TODO(synk): MLP internals (Linear-ReLU-Linear) assumed; class source not given.
    cf = jnp.dot(w2_ref[...], h1.astype(jnp.bfloat16),
                 preferred_element_type=jnp.float32) + b2                         # (24, TN)

    colour = cf[COLOUR_OFF:COLOUR_OFF + COLOUR_DIM]                               # (8, TN)

    # bg_rob_obj_head on colour_embd + softmax over the 2 classes
    hh = jnp.maximum(
        jnp.dot(w1h_ref[...], colour.astype(jnp.bfloat16),
                preferred_element_type=jnp.float32) + b1h, 0.0)
    logits = jnp.dot(w2h_ref[...], hh.astype(jnp.bfloat16),
                     preferred_element_type=jnp.float32) + b2h                    # (2, TN)
    l0 = logits[0:1]
    l1 = logits[1:2]
    m = jnp.maximum(l0, l1)
    e0 = jnp.exp(l0 - m)
    e1 = jnp.exp(l1 - m)
    inv = pl.reciprocal(e0 + e1, approx=True)     # EUP slot

    cf_ref[0] = cf                                                    # single 24-row store
    prob_ref[0] = jnp.concatenate([e0 * inv, e1 * inv], axis=0)       # single 2-row store


def run_heads(x_packed, w1, w2, w1h, w2h, bias_slab):
    bsz, _, n = x_packed.shape
    tn = _pick_tile(n)
    grid = (bsz, n // tn)

    def const_spec(shape):
        return pl.BlockSpec(shape, lambda b, j: (0,) * len(shape))

    in_specs = [
        pl.BlockSpec((1, IN_ROWS, tn), lambda b, j: (b, 0, j)),
        const_spec(w1.shape), const_spec(w2.shape),
        const_spec(w1h.shape), const_spec(w2h.shape), const_spec(bias_slab.shape),
    ]
    out_specs = [
        pl.BlockSpec((1, SLAB_ROWS, tn), lambda b, j: (b, 0, j)),
        pl.BlockSpec((1, 2, tn), lambda b, j: (b, 0, j)),   # row dim == full dim -> legal
    ]
    out_shape = [
        jax.ShapeDtypeStruct((bsz, SLAB_ROWS, n), jnp.float32),
        jax.ShapeDtypeStruct((bsz, 2, n), jnp.float32),
    ]
    return pl.pallas_call(
        heads_kernel,
        grid=grid,
        in_specs=in_specs,
        out_specs=out_specs,
        out_shape=out_shape,
        compiler_params=pltpu.CompilerParams(
            dimension_semantics=("parallel", "parallel"),
            vmem_limit_bytes=VMEM_LIMIT),
    )(x_packed, w1, w2, w1h, w2h, bias_slab)


def pack_heads_inputs(enc_t, pcd2_t):
    """Fused channel-first bf16 input slab for the heads kernel."""
    # TODO(synk): PointEncoderKPConv (p_enc) source not provided — in the full model
    # it would emit this fused (B, 24, N) bf16 slab directly (no extra HBM concat).
    bsz, _, n = enc_t.shape
    pad = jnp.zeros((bsz, IN_ROWS - ENC_DIM - 3, n), jnp.float32)
    return jnp.concatenate([enc_t, pcd2_t, pad], axis=1).astype(jnp.bfloat16)


def pack_heads_params(Wpos, W1c, b1c, W2c, b2c, W1f, b1f, W2f, b2f,
                      W1h, b1h, W2h, b2h):
    """Fuse colour/feature MLPs + position_net into block matmuls; pack biases."""
    w1 = jnp.zeros((2 * HID, IN_ROWS), jnp.float32)
    w1 = w1.at[:HID, :ENC_DIM].set(W1c)
    w1 = w1.at[HID:, :ENC_DIM].set(W1f)
    w1 = w1.at[:HID, PCD_OFF:PCD_OFF + 3].set(W1c @ Wpos)      # position_net folded
    w2 = jnp.zeros((L2_OUT, 2 * HID), jnp.float32)
    w2 = w2.at[:COLOUR_DIM, :HID].set(W2c)
    w2 = w2.at[COLOUR_DIM:, HID:].set(W2f)                     # block-diagonal (24, 64)
    bias = jnp.zeros((BIAS_ROWS, 1), jnp.float32)
    bias = bias.at[B1_OFF:B1_OFF + HID, 0].set(b1c)
    bias = bias.at[B1_OFF + HID:B1_OFF + 2 * HID, 0].set(b1f)
    bias = bias.at[B2_OFF:B2_OFF + COLOUR_DIM, 0].set(b2c)
    bias = bias.at[B2_OFF + COLOUR_DIM:B2_OFF + L2_OUT, 0].set(b2f)
    bias = bias.at[B1H_OFF:B1H_OFF + HID, 0].set(b1h)
    bias = bias.at[B2H_OFF:B2H_OFF + 2, 0].set(b2h)
    return (w1.astype(jnp.bfloat16), w2.astype(jnp.bfloat16),
            W1h.astype(jnp.bfloat16), W2h.astype(jnp.bfloat16), bias)


# ---------------------------------------------------------------- obj_att ----
def obj_att_kernel(ce_ref, prob_ref, rp_ref, bu_ref,
                   attn_ref, remain_ref, idle_ref):
    ce = ce_ref[0]                                           # (D, N)  colour_embd^T (f32)
    n = ce.shape[1]

    mask = prob_ref[0, 1:2, :]                               # (1, N) obj-class probability
    mask = jnp.clip(mask, 1e-6, 1.0 - 1e-6)                  # clamp_preserve_gradients (fwd)
    log_s = jnp.log(mask)

    # hoisted out of the K loop
    ce_sq = jnp.sum(ce * ce, axis=0, keepdims=True)          # (1, N)
    col_iota = lax.broadcasted_iota(jnp.int32, (1, n), 1)

    rows = []
    idles = []
    for k in range(K):
        scope = jnp.exp(log_s)                               # (1, N)
        pp = rp_ref[0, k:k + 1, :] * scope                   # rand_pixel * scope
        gap = scope - bu_ref[0, k:k + 1, :]                  # >0 where Bernoulli sample == 1

        # one fused cross-lane reduce for (argmax value, idle test)
        red = jnp.max(jnp.concatenate([pp, gap], axis=0), axis=1, keepdims=True)  # (2, 1)
        mx = red[0:1, 0:1]
        idle = (red[1:2, 0:1] <= 0.0).astype(jnp.float32)    # all samples zero -> idle

        # argmax with lowest-index tie-break (ties are measure-zero for uniforms)
        idxv = jnp.min(jnp.where(pp >= mx, col_iota, n))
        onehot = jnp.where(col_iota == idxv, 1.0, 0.0)       # (1, N)

        # seed gather + squared distance on the MXU (idle unit in this serial loop):
        #   seed_row = onehot · ce^T      -> (1, D)
        #   dist     = |ce|^2 - 2 seed·ce + |seed|^2
        seed_row = lax.dot_general(onehot, ce, (((1,), (1,)), ((), ())),
                                   preferred_element_type=jnp.float32)            # (1, D)
        cross = lax.dot_general(seed_row, ce, (((1,), (0,)), ((), ())),
                                preferred_element_type=jnp.float32)               # (1, N)
        seed_sq = jnp.sum(seed_row * seed_row, axis=1, keepdims=True)             # (1, 1)
        dist = ce_sq - 2.0 * cross + seed_sq
        alpha = jnp.clip(jnp.exp(-dist / SIGMA_VAL), 1e-6, 1.0 - 1e-6)

        keep = 1.0 - idle
        # exp(log_s + log(alpha)) == scope * alpha  (no extra EUP exp)
        rows.append(scope * alpha * keep)
        idles.append(idle)
        log_s = log_s + jnp.log(1.0 - alpha) * keep

    attn_ref[0] = jnp.concatenate(rows, axis=0)              # single (K, N) store
    remain_ref[0] = jnp.exp(log_s)                           # (1, N)
    idle_ref[0] = jnp.concatenate(idles, axis=1)             # single (1, K) store


def run_obj_att(heads_slab, prob, rand_pixel, bern_u):
    bsz, _, n = heads_slab.shape
    in_specs = [
        # colour embedding = rows 0:8 of the 24-row heads slab (block index 0)
        pl.BlockSpec((1, COLOUR_DIM, n), lambda b: (b, 0, 0)),
        # 2-row softmax-prob output of the heads kernel; obj class is row 1
        pl.BlockSpec((1, 2, n), lambda b: (b, 0, 0)),
        pl.BlockSpec((1, K, n), lambda b: (b, 0, 0)),
        pl.BlockSpec((1, K, n), lambda b: (b, 0, 0)),
    ]
    out_specs = [
        pl.BlockSpec((1, K, n), lambda b: (b, 0, 0)),
        pl.BlockSpec((1, 1, n), lambda b: (b, 0, 0)),
        pl.BlockSpec((1, 1, K), lambda b: (b, 0, 0)),
    ]
    out_shape = [
        jax.ShapeDtypeStruct((bsz, K, n), jnp.float32),
        jax.ShapeDtypeStruct((bsz, 1, n), jnp.float32),
        jax.ShapeDtypeStruct((bsz, 1, K), jnp.float32),
    ]
    attn, remain, idle = pl.pallas_call(
        obj_att_kernel,
        grid=(bsz,),
        in_specs=in_specs,
        out_specs=out_specs,
        out_shape=out_shape,
        compiler_params=pltpu.CompilerParams(
            dimension_semantics=("parallel",),
            vmem_limit_bytes=VMEM_LIMIT),
    )(heads_slab, prob, rand_pixel, bern_u)
    att_obj = attn                 # (B, K, N)
    remain_mask = remain[:, 0, :]  # (B, N)
    idle_states = idle[:, 0, :]    # (B, K)
    return att_obj, remain_mask, idle_states


# -------------------------------------------------------------- eval_sigma ---
def _softplus(x):
    return jnp.log1p(jnp.exp(-jnp.abs(x))) + jnp.maximum(x, 0.0)


def eval_sigma_kernel(obj_s_ref, bg_s_ref, obj_a_ref, bg_a_ref, surf_ref, air_ref):
    ls_o = obj_s_ref[0]                                   # (K, TN)
    ls_b = bg_s_ref[0]                                    # (1, TN)

    joint_s = jnp.tanh(_softplus(ls_b) +
                       jnp.sum(_softplus(ls_o), axis=0, keepdims=True))      # (1, TN)
    m = jnp.maximum(ls_b, jnp.max(ls_o, axis=0, keepdims=True))
    e_b = jnp.exp(ls_b - m)
    e_o = jnp.exp(ls_o - m)
    scale = joint_s * pl.reciprocal(e_b + jnp.sum(e_o, axis=0, keepdims=True),
                                    approx=True)          # EUP slot
    surf_ref[0] = jnp.concatenate([e_b * scale, e_o * scale], axis=0)   # single (K+1) store

    la_o = obj_a_ref[0]
    la_b = bg_a_ref[0]
    air_ref[0] = jnp.tanh(_softplus(la_b) +
                          jnp.sum(_softplus(la_o), axis=0, keepdims=True))   # (1, TN)


def run_eval_sigma(obj_logits_air, obj_logits_surface,
                   bg_logits_air, bg_logits_surface):
    bsz, kk, npix = obj_logits_surface.shape
    tn = _pick_tile(npix)
    grid = (bsz, npix // tn)
    in_specs = [
        pl.BlockSpec((1, kk, tn), lambda b, j: (b, 0, j)),
        pl.BlockSpec((1, 1, tn), lambda b, j: (b, 0, j)),
        pl.BlockSpec((1, kk, tn), lambda b, j: (b, 0, j)),
        pl.BlockSpec((1, 1, tn), lambda b, j: (b, 0, j)),
    ]
    out_specs = [
        pl.BlockSpec((1, kk + 1, tn), lambda b, j: (b, 0, j)),
        pl.BlockSpec((1, 1, tn), lambda b, j: (b, 0, j)),
    ]
    out_shape = [
        jax.ShapeDtypeStruct((bsz, kk + 1, npix), jnp.float32),
        jax.ShapeDtypeStruct((bsz, 1, npix), jnp.float32),
    ]
    sigma_surface, sigma_air = pl.pallas_call(
        eval_sigma_kernel,
        grid=grid,
        in_specs=in_specs,
        out_specs=out_specs,
        out_shape=out_shape,
        compiler_params=pltpu.CompilerParams(
            dimension_semantics=("parallel", "parallel"),
            vmem_limit_bytes=VMEM_LIMIT),
    )(obj_logits_surface, bg_logits_surface, obj_logits_air, bg_logits_air)
    # kept lane-dense (B, ., NPIX); the PyTorch trailing singleton / (0,2,1) layout
    # is left to the downstream consumer to avoid an XLA relayout round-trip.
    return sigma_air, sigma_surface


# ----------------------------------------------------------------- driver ----
if __name__ == "__main__":
    key = jax.random.PRNGKey(0)
    keys = jax.random.split(key, 12)

    pcd = jax.random.normal(keys[0], (B, N, 3), jnp.float32)
    rgb = jax.random.uniform(keys[1], (B, N, 3), jnp.float32)   # only feeds synthetic p_enc / losses

    # TODO(synk): PointEncoderKPConv (p_enc) source not provided — its outputs
    # (pcd2, per-point encoding enc, scene_enc) are synthesized here in the
    # channel-first layout the kernels consume.
    pcd2_t = jnp.transpose(pcd, (0, 2, 1))                      # (B, 3, N)
    enc_t = jax.random.normal(keys[2], (B, ENC_DIM, N), jnp.float32) * 0.5
    x_packed = pack_heads_inputs(enc_t, pcd2_t)                 # (B, 24, N) bf16

    # deterministic parameter init (shapes from __init__), PyTorch (out, in) convention
    pk = jax.random.split(keys[3], 13)

    def winit(k, shape, scale=0.1):
        return jax.random.normal(k, shape, jnp.float32) * scale

    Wpos = winit(pk[0], (ENC_DIM, 3))                               # position_net (no bias)
    W1c = winit(pk[1], (HID, ENC_DIM)); b1c = winit(pk[2], (HID,), 0.01)
    W2c = winit(pk[3], (COLOUR_DIM, HID)); b2c = winit(pk[4], (COLOUR_DIM,), 0.01)
    W1f = winit(pk[5], (HID, ENC_DIM)); b1f = winit(pk[6], (HID,), 0.01)
    W2f = winit(pk[7], (FEATURE_DIM, HID)); b2f = winit(pk[8], (FEATURE_DIM,), 0.01)
    W1h = winit(pk[9], (HID, COLOUR_DIM)); b1h = winit(pk[10], (HID,), 0.01)
    W2h = winit(pk[11], (2, HID)); b2h = winit(pk[12], (2,), 0.01)

    w1, w2, w1h, w2h, bias_slab = pack_heads_params(
        Wpos, W1c, b1c, W2c, b2c, W1f, b1f, W2f, b2f, W1h, b1h, W2h, b2h)

    heads_slab, bg_rob_obj_prob = run_heads(x_packed, w1, w2, w1h, w2h, bias_slab)
    # channel-first views (glue; no (0,2,1) transposes — consumers stay lane-dense)
    colour_embd = heads_slab[:, COLOUR_OFF:COLOUR_OFF + COLOUR_DIM, :]    # (B, 8, N)
    feature_embd = heads_slab[:, FEAT_OFF:FEAT_OFF + FEATURE_DIM, :]      # (B, 16, N)

    # obj_att (stochastic parts realized with deterministic PRNGKey draws),
    # consuming the heads outputs directly in (C, N) layout
    rand_pixel = jax.random.uniform(keys[4], (B, K, N), jnp.float32)
    bern_u = jax.random.uniform(keys[5], (B, K, N), jnp.float32)
    att_obj, remain_mask, idle_states = run_obj_att(
        heads_slab, bg_rob_obj_prob, rand_pixel, bern_u)

    # feature_obj = feature_embd[:,None].repeat(1,K,1,1) * att_obj[...,None]
    # (glue, channel-first layout: (B, K, FEATURE_DIM, N))
    feature_obj = feature_embd[:, None, :, :] * att_obj[:, :, None, :]

    # TODO(synk): Nerf / ObjectModule / Background / UpSample and the loss terms
    # that depend on them (rgb_loss, ic_loss, kl terms, compute_camera's
    # torch.inverse path) are not reproducible from the given source; synthetic
    # logits feed eval_sigma below.
    obj_logits_surface = jax.random.normal(keys[6], (B, K, NPIX), jnp.float32)
    obj_logits_air = jax.random.normal(keys[7], (B, K, NPIX), jnp.float32)
    bg_logits_surface = jax.random.normal(keys[8], (B, 1, NPIX), jnp.float32)
    bg_logits_air = jax.random.normal(keys[9], (B, 1, NPIX), jnp.float32)

    sigma_air, sigma_surface = run_eval_sigma(obj_logits_air, obj_logits_surface,
                                              bg_logits_air, bg_logits_surface)

    for x in (heads_slab, bg_rob_obj_prob, colour_embd, feature_embd, att_obj,
              remain_mask, idle_states, feature_obj, sigma_air, sigma_surface):
        jax.block_until_ready(x)
    print("KERNEL_OK")
</pallas_src>

<mosaic_0001>
module attributes {stable_mosaic.version = 11 : i64} {
  func.func @heads_kernel(%arg0: i32, %arg1: i32, %arg2: memref<1x24x256xbf16, #tpu.memory_space<vmem>>, %arg3: memref<64x24xbf16, #tpu.memory_space<vmem>>, %arg4: memref<24x64xbf16, #tpu.memory_space<vmem>>, %arg5: memref<32x8xbf16, #tpu.memory_space<vmem>>, %arg6: memref<2x32xbf16, #tpu.memory_space<vmem>>, %arg7: memref<128x1xf32, #tpu.memory_space<vmem>>, %arg8: memref<1x24x256xf32, #tpu.memory_space<vmem>>, %arg9: memref<1x2x256xf32, #tpu.memory_space<vmem>>) attributes {dimension_semantics = [#tpu.dimension_semantics<parallel>, #tpu.dimension_semantics<parallel>], iteration_bounds = array<i64: 2, 1>, scalar_prefetch = 0 : i64, scratch_operands = 0 : i64, tpu.core_type = #tpu.core_type<tc>, window_params = [{transform_indices = @transform_0, window_bounds = array<i64: 1, 24, 256>}, {pipeline_mode = #tpu.pipeline_mode<synchronous>, transform_indices = @transform_1, window_bounds = array<i64: 64, 24>}, {pipeline_mode = #tpu.pipeline_mode<synchronous>, transform_indices = @transform_2, window_bounds = array<i64: 24, 64>}, {pipeline_mode = #tpu.pipeline_mode<synchronous>, transform_indices = @transform_3, window_bounds = array<i64: 32, 8>}, {pipeline_mode = #tpu.pipeline_mode<synchronous>, transform_indices = @transform_4, window_bounds = array<i64: 2, 32>}, {pipeline_mode = #tpu.pipeline_mode<synchronous>, transform_indices = @transform_5, window_bounds = array<i64: 128, 1>}, {transform_indices = @transform_6, window_bounds = array<i64: 1, 24, 256>}, {transform_indices = @transform_7, window_bounds = array<i64: 1, 2, 256>}]} {
    %c0 = arith.constant 0 : index
    %c0_0 = arith.constant 0 : index
    %c0_1 = arith.constant 0 : index
    %0 = vector.load %arg2[%c0, %c0_0, %c0_1] : memref<1x24x256xbf16, #tpu.memory_space<vmem>>, vector<1x24x256xbf16>
    %1 = vector.shape_cast %0 : vector<1x24x256xbf16> to vector<24x256xbf16>
    %c0_2 = arith.constant 0 : index
    %c0_3 = arith.constant 0 : index
    %2 = vector.load %arg7[%c0_2, %c0_3] : memref<128x1xf32, #tpu.memory_space<vmem>>, vector<128x1xf32>
    %3 = vector.extract_strided_slice %2 {offsets = [0, 0], sizes = [64, 1], strides = [1, 1]} : vector<128x1xf32> to vector<64x1xf32>
    %4 = vector.extract_strided_slice %2 {offsets = [64, 0], sizes = [24, 1], strides = [1, 1]} : vector<128x1xf32> to vector<24x1xf32>
    %5 = vector.extract_strided_slice %2 {offsets = [88, 0], sizes = [32, 1], strides = [1, 1]} : vector<128x1xf32> to vector<32x1xf32>
    %6 = vector.extract_strided_slice %2 {offsets = [120, 0], sizes = [2, 1], strides = [1, 1]} : vector<128x1xf32> to vector<2x1xf32>
    %c0_4 = arith.constant 0 : index
    %c0_5 = arith.constant 0 : index
    %7 = vector.load %arg3[%c0_4, %c0_5] : memref<64x24xbf16, #tpu.memory_space<vmem>>, vector<64x24xbf16>
    %cst = arith.constant dense<0.000000e+00> : vector<64x256xf32>
    %8 = tpu.matmul %7, %1, %cst {dimension_numbers = #tpu.dot_dimension_numbers<[1], [0], [0], [1], [0, 0, 1, 1], [], []>} : vector<64x24xbf16>, vector<24x256xbf16>, vector<64x256xf32> -> vector<64x256xf32>
    %9 = vector.broadcast %3 : vector<64x1xf32> to vector<64x256xf32>
    %10 = arith.addf %8, %9 : vector<64x256xf32>
    %cst_6 = arith.constant 0.000000e+00 : f32
    %11 = vector.broadcast %cst_6 : f32 to vector<64x256xf32>
    %12 = arith.maximumf %10, %11 : vector<64x256xf32>
    %c0_7 = arith.constant 0 : index
    %c0_8 = arith.constant 0 : index
    %13 = vector.load %arg4[%c0_7, %c0_8] : memref<24x64xbf16, #tpu.memory_space<vmem>>, vector<24x64xbf16>
    %14 = arith.truncf %12 : vector<64x256xf32> to vector<64x256xbf16>
    %cst_9 = arith.constant dense<0.000000e+00> : vector<24x256xf32>
    %15 = tpu.matmul %13, %14, %cst_9 {dimension_numbers = #tpu.dot_dimension_numbers<[1], [0], [0], [1], [0, 0, 1, 1], [], []>} : vector<24x64xbf16>, vector<64x256xbf16>, vector<24x256xf32> -> vector<24x256xf32>
    %16 = vector.broadcast %4 : vector<24x1xf32> to vector<24x256xf32>
    %17 = arith.addf %15, %16 : vector<24x256xf32>
    %18 = vector.extract_strided_slice %17 {offsets = [0, 0], sizes = [8, 256], strides = [1, 1]} : vector<24x256xf32> to vector<8x256xf32>
    %c0_10 = arith.constant 0 : index
    %c0_11 = arith.constant 0 : index
    %19 = vector.load %arg5[%c0_10, %c0_11] : memref<32x8xbf16, #tpu.memory_space<vmem>>, vector<32x8xbf16>
    %20 = arith.truncf %18 : vector<8x256xf32> to vector<8x256xbf16>
    %cst_12 = arith.constant dense<0.000000e+00> : vector<32x256xf32>
    %21 = tpu.matmul %19, %20, %cst_12 {dimension_numbers = #tpu.dot_dimension_numbers<[1], [0], [0], [1], [0, 0, 1, 1], [], []>} : vector<32x8xbf16>, vector<8x256xbf16>, vector<32x256xf32> -> vector<32x256xf32>
    %22 = vector.broadcast %5 : vector<32x1xf32> to vector<32x256xf32>
    %23 = arith.addf %21, %22 : vector<32x256xf32>
    %cst_13 = arith.constant 0.000000e+00 : f32
    %24 = vector.broadcast %cst_13 : f32 to vector<32x256xf32>
    %25 = arith.maximumf %23, %24 : vector<32x256xf32>
    %c0_14 = arith.constant 0 : index
    %c0_15 = arith.constant 0 : index
    %26 = vector.load %arg6[%c0_14, %c0_15] : memref<2x32xbf16, #tpu.memory_space<vmem>>, vector<2x32xbf16>
    %27 = arith.truncf %25 : vector<32x256xf32> to vector<32x256xbf16>
    %cst_16 = arith.constant dense<0.000000e+00> : vector<2x256xf32>
    %28 = tpu.matmul %26, %27, %cst_16 {dimension_numbers = #tpu.dot_dimension_numbers<[1], [0], [0], [1], [0, 0, 1, 1], [], []>} : vector<2x32xbf16>, vector<32x256xbf16>, vector<2x256xf32> -> vector<2x256xf32>
    %29 = vector.broadcast %6 : vector<2x1xf32> to vector<2x256xf32>
    %30 = arith.addf %28, %29 : vector<2x256xf32>
    %31 = vector.extract_strided_slice %30 {offsets = [0, 0], sizes = [1, 256], strides = [1, 1]} : vector<2x256xf32> to vector<1x256xf32>
    %32 = vector.extract_strided_slice %30 {offsets = [1, 0], sizes = [1, 256], strides = [1, 1]} : vector<2x256xf32> to vector<1x256xf32>
    %33 = arith.maximumf %31, %32 : vector<1x256xf32>
    %34 = arith.subf %31, %33 : vector<1x256xf32>
    %35 = math.exp %34 : vector<1x256xf32>
    %36 = arith.subf %32, %33 : vector<1x256xf32>
    %37 = math.exp %36 : vector<1x256xf32>
    %38 = arith.addf %35, %37 : vector<1x256xf32>
    %39 = tpu.reciprocal %38 {approx = true} : vector<1x256xf32> -> vector<1x256xf32>
    %c0_17 = arith.constant 0 : index
    %c0_18 = arith.constant 0 : index
    %c0_19 = arith.constant 0 : index
    %40 = vector.load %arg8[%c0_17, %c0_18, %c0_19] : memref<1x24x256xf32, #tpu.memory_space<vmem>>, vector<1x24x256xf32>
    %41 = vector.shape_cast %40 : vector<1x24x256xf32> to vector<24x256xf32>
    %42 = vector.shape_cast %17 : vector<24x256xf32> to vector<1x24x256xf32>
    tpu.vector_store %arg8[%c0_17, %c0_18, %c0_19], %42 {strides = array<i32>} : memref<1x24x256xf32, #tpu.memory_space<vmem>>, vector<1x24x256xf32>,
    %43 = arith.mulf %35, %39 : vector<1x256xf32>
    %44 = arith.mulf %37, %39 : vector<1x256xf32>
    %45 = tpu.concatenate %43, %44 in 0 : vector<1x256xf32>, vector<1x256xf32> -> vector<2x256xf32>
    %c0_20 = arith.constant 0 : index
    %c0_21 = arith.constant 0 : index
    %c0_22 = arith.constant 0 : index
    %46 = vector.load %arg9[%c0_20, %c0_21, %c0_22] : memref<1x2x256xf32, #tpu.memory_space<vmem>>, vector<1x2x256xf32>
    %47 = vector.shape_cast %46 : vector<1x2x256xf32> to vector<2x256xf32>
    %48 = vector.shape_cast %45 : vector<2x256xf32> to vector<1x2x256xf32>
    tpu.vector_store %arg9[%c0_20, %c0_21, %c0_22], %48 {strides = array<i32>} : memref<1x2x256xf32, #tpu.memory_space<vmem>>, vector<1x2x256xf32>,
    return
  }
  func.func @transform_0(%arg0: i32, %arg1: i32) -> (i32, i32, i32) {
    %c0_i32 = arith.constant 0 : i32
    %c0_i32_0 = arith.constant 0 : i32
    return %arg0, %c0_i32, %arg1 : i32, i32, i32
  }
  func.func @transform_1(%arg0: i32, %arg1: i32) -> (i32, i32) {
    %c0_i32 = arith.constant 0 : i32
    %c0_i32_0 = arith.constant 0 : i32
    %c0_i32_1 = arith.constant 0 : i32
    return %c0_i32, %c0_i32_0 : i32, i32
  }
  func.func @transform_2(%arg0: i32, %arg1: i32) -> (i32, i32) {
    %c0_i32 = arith.constant 0 : i32
    %c0_i32_0 = arith.constant 0 : i32
    %c0_i32_1 = arith.constant 0 : i32
    return %c0_i32, %c0_i32_0 : i32, i32
  }
  func.func @transform_3(%arg0: i32, %arg1: i32) -> (i32, i32) {
    %c0_i32 = arith.constant 0 : i32
    %c0_i32_0 = arith.constant 0 : i32
    %c0_i32_1 = arith.constant 0 : i32
    return %c0_i32, %c0_i32_0 : i32, i32
  }
  func.func @transform_4(%arg0: i32, %arg1: i32) -> (i32, i32) {
    %c0_i32 = arith.constant 0 : i32
    %c0_i32_0 = arith.constant 0 : i32
    %c0_i32_1 = arith.constant 0 : i32
    return %c0_i32, %c0_i32_0 : i32, i32
  }
  func.func @transform_5(%arg0: i32, %arg1: i32) -> (i32, i32) {
    %c0_i32 = arith.constant 0 : i32
    %c0_i32_0 = arith.constant 0 : i32
    %c0_i32_1 = arith.constant 0 : i32
    return %c0_i32, %c0_i32_0 : i32, i32
  }
  func.func @transform_6(%arg0: i32, %arg1: i32) -> (i32, i32, i32) {
    %c0_i32 = arith.constant 0 : i32
    %c0_i32_0 = arith.constant 0 : i32
    return %arg0, %c0_i32, %arg1 : i32, i32, i32
  }
  func.func @transform_7(%arg0: i32, %arg1: i32) -> (i32, i32, i32) {
    %c0_i32 = arith.constant 0 : i32
    %c0_i32_0 = arith.constant 0 : i32
    return %arg0, %c0_i32, %arg1 : i32, i32, i32
  }
}

</mosaic_0001>

<llo_original>
// kernel: tpu_custom_call.1
$region0: #{tpu_custom_call.1}
  #allocation0 [shape = 'u32[]', space=smem, size = 0x4, offset = 0x4, fixed_abs, tag = 'smem constant byte address 0x4 - core index']
  #allocation1 [shape = 'u32[144,128]{1,0:T(1,128)}', space=vmem, size = 0x12000, scoped, tag = 'internal scratch']
  %s0 = inlined_call_operand.vmem [shape: bf16[2,24,256], index: 0, kind: input, shape index: {}]
  %s1 = inlined_call_operand.vmem [shape: bf16[64,24], index: 1, kind: input, shape index: {}]
  %s2 = inlined_call_operand.vmem [shape: bf16[24,64], index: 2, kind: input, shape index: {}]
  %s3 = inlined_call_operand.vmem [shape: bf16[32,8], index: 3, kind: input, shape index: {}]
  %s4 = inlined_call_operand.vmem [shape: bf16[2,32], index: 4, kind: input, shape index: {}]
  %s5 = inlined_call_operand.vmem [shape: f32[128,1], index: 5, kind: input, shape index: {}]
  %s6 = inlined_call_operand.hbm [shape: f32[2,24,256], index: 6, kind: output, shape index: {0}]
  %s7 = inlined_call_operand.hbm [shape: f32[2,2,256], index: 7, kind: output, shape index: {1}]
  %8 = xla_tuple %s6, %s7
  %s9 = sld [smem:[#allocation0]]
  $region65: #{tpu_custom_call.1} parent=0
    _
  %s11 = ssub.s32 1, %s9
  %s12 = scalar_select 0, %s11, %s9
  $region1: #{tpu_custom_call.1} parent=0
    #allocation2 [shape = 'u8[49152]{0}', space=vmem, size = 0xc000, scoped, tag = 'output window, operand 0']
    #allocation3 [shape = 's32[2]{0}', space=sflag, size = 0x8, scoped, tag = 'scoped memory for tpu_custom_call.1']
    #allocation4 [shape = 'u8[4096]{0}', space=vmem, size = 0x1000, scoped, tag = 'output window, operand 1']
    #allocation5 [shape = 's32[2]{0}', space=sflag, size = 0x8, scoped, tag = 'scoped memory for tpu_custom_call.1']
    %13 = vsyncpa [#allocation3], 0
    %s14 = scalar_lea.sflag [#allocation3], 1
    %15 = vsyncpa %s14, 0
    %16 = vsyncpa [#allocation5], 0
    %s17 = scalar_lea.sflag [#allocation5], 1
    %18 = vsyncpa %s17, 0
    loop: start=0, step=1, limit=4
    $region2: #{tpu_custom_call.1} parent=1 // loop_pre_header
      _
    $region3: #{tpu_custom_call.1} parent=1 // loop_header
      %s20 = sphi 0, %s24
      %p21 = scmp.ge.s32.totalorder %s20, 4
      %s27 = sphi 0, %s39
      %s28 = sphi 0, %s35
      %s29 = sphi 0, %s27
      %s30 = sphi 0, %s28
      %s31 = sphi 0, %s29
      %s32 = sphi 0, %s30
      %s44 = sphi 0, %s46
      %s47 = sphi 0, %s44
      %s48 = sphi 0, %s47
      %s64 = sphi 0, %s48
      %s68 = sphi 0, %s68
      %s70 = sphi 0, %s68
      %s71 = sphi 0, %s70
      %s85 = sphi 0, %s71
      %s89 = sphi 0, %s89
      %s91 = sphi 0, %s89
      %s92 = sphi 0, %s91
      %s106 = sphi 0, %s92
      %s110 = sphi 0, %s110
      %s112 = sphi 0, %s110
      %s113 = sphi 0, %s112
      %s127 = sphi 0, %s113
      %s131 = sphi 0, %s131
      %s133 = sphi 0, %s131
      %s134 = sphi 0, %s133
      %s148 = sphi 0, %s134
      %s152 = sphi 0, %s152
      %s154 = sphi 0, %s152
      %s155 = sphi 0, %s154
      %s169 = sphi 0, %s155
      %s177 = sphi 0, %s179
      %s180 = sphi 0, %s177
      %s181 = sphi 0, %s180
      %s197 = sphi 0, %s181
      %s205 = sphi 0, %s207
      %s208 = sphi 0, %s205
      %s209 = sphi 0, %s208
      %s225 = sphi 0, %s209
    $region4: #{tpu_custom_call.1} parent=1 // loop_header_branch
      %23 = sbr.rel (%p21) target = $region8
    $region5: #{tpu_custom_call.1} parent=1 // loop_body
      %s25 = ssub.s32 %s20, 1
      %s26 = ssub.s32 %s20, 2
      %s33 = sadd.s32 1, %s28
      %p34 = scmp.ge.s32.totalorder %s33, 1
      %s35 = scalar_select %p34, 0, %s33
      %s36 = sadd.s32 1, %s27
      %s37 = scalar_select %p34, %s36, %s27
      %p38 = scmp.ge.s32.totalorder %s37, 2
      %s39 = scalar_select %p38, 0, %s37
      %s40 = ssub.s32 %s27, %s39
      %s41 = ssub.s32 %s28, %s35
      %s42 = sor.u32 %s40, %s41
      %p43 = scmp.eq.s32.totalorder %s42, 0
      %s45 = sadd.s32 %s44, 1
      %s46 = scalar_select %p43, %s44, %s45
      %p49 = pneg %p43
      %p50 = scmp.eq.s32.totalorder %s20, 1
      %p51 = por %p49, %p50
      %p52 = scmp.ne.s32.totalorder %s44, %s47
      %p53 = scmp.eq.s32.totalorder %s20, 0
      %p54 = por %p52, %p53
      %p55 = scmp.ne.s32.totalorder %s44, %s47
      %p56 = scmp.eq.s32.totalorder %s25, 1
      %p57 = por %p55, %p56
      %p58 = scmp.ne.s32.totalorder %s47, %s48
      %p59 = scmp.eq.s32.totalorder %s25, 0
      %p60 = por %p58, %p59
      %p61 = scmp.ne.s32.totalorder %s47, %s48
      %p62 = scmp.eq.s32.totalorder %s26, 1
      %p63 = por %p61, %p62
      %p65 = scmp.ne.s32.totalorder %s48, %s64
      %p66 = scmp.eq.s32.totalorder %s26, 0
      %p67 = por %p65, %p66
      %s69 = sadd.s32 %s68, 1
      %p72 = scmp.eq.s32.totalorder %s20, 1
      %p73 = scmp.ne.s32.totalorder %s68, %s70
      %p74 = scmp.eq.s32.totalorder %s20, 0
      %p75 = por %p73, %p74
      %p76 = scmp.ne.s32.totalorder %s68, %s70
      %p77 = scmp.eq.s32.totalorder %s25, 1
      %p78 = por %p76, %p77
      %p79 = scmp.ne.s32.totalorder %s70, %s71
      %p80 = scmp.eq.s32.totalorder %s25, 0
      %p81 = por %p79, %p80
      %p82 = scmp.ne.s32.totalorder %s70, %s71
      %p83 = scmp.eq.s32.totalorder %s26, 1
      %p84 = por %p82, %p83
      %p86 = scmp.ne.s32.totalorder %s71, %s85
      %p87 = scmp.eq.s32.totalorder %s26, 0
      %p88 = por %p86, %p87
      %s90 = sadd.s32 %s89, 1
      %p93 = scmp.eq.s32.totalorder %s20, 1
      %p94 = scmp.ne.s32.totalorder %s89, %s91
      %p95 = scmp.eq.s32.totalorder %s20, 0
      %p96 = por %p94, %p95
      %p97 = scmp.ne.s32.totalorder %s89, %s91
      %p98 = scmp.eq.s32.totalorder %s25, 1
      %p99 = por %p97, %p98
      %p100 = scmp.ne.s32.totalorder %s91, %s92
      %p101 = scmp.eq.s32.totalorder %s25, 0
      %p102 = por %p100, %p101
      %p103 = scmp.ne.s32.totalorder %s91, %s92
      %p104 = scmp.eq.s32.totalorder %s26, 1
      %p105 = por %p103, %p104
      %p107 = scmp.ne.s32.totalorder %s92, %s106
      %p108 = scmp.eq.s32.totalorder %s26, 0
      %p109 = por %p107, %p108
      %s111 = sadd.s32 %s110, 1
      %p114 = scmp.eq.s32.totalorder %s20, 1
      %p115 = scmp.ne.s32.totalorder %s110, %s112
      %p116 = scmp.eq.s32.totalorder %s20, 0
      %p117 = por %p115, %p116
      %p118 = scmp.ne.s32.totalorder %s110, %s112
      %p119 = scmp.eq.s32.totalorder %s25, 1
      %p120 = por %p118, %p119
      %p121 = scmp.ne.s32.totalorder %s112, %s113
      %p122 = scmp.eq.s32.totalorder %s25, 0
      %p123 = por %p121, %p122
      %p124 = scmp.ne.s32.totalorder %s112, %s113
      %p125 = scmp.eq.s32.totalorder %s26, 1
      %p126 = por %p124, %p125
      %p128 = scmp.ne.s32.totalorder %s113, %s127
      %p129 = scmp.eq.s32.totalorder %s26, 0
      %p130 = por %p128, %p129
      %s132 = sadd.s32 %s131, 1
      %p135 = scmp.eq.s32.totalorder %s20, 1
      %p136 = scmp.ne.s32.totalorder %s131, %s133
      %p137 = scmp.eq.s32.totalorder %s20, 0
      %p138 = por %p136, %p137
      %p139 = scmp.ne.s32.totalorder %s131, %s133
      %p140 = scmp.eq.s32.totalorder %s25, 1
      %p141 = por %p139, %p140
      %p142 = scmp.ne.s32.totalorder %s133, %s134
      %p143 = scmp.eq.s32.totalorder %s25, 0
      %p144 = por %p142, %p143
      %p145 = scmp.ne.s32.totalorder %s133, %s134
      %p146 = scmp.eq.s32.totalorder %s26, 1
      %p147 = por %p145, %p146
      %p149 = scmp.ne.s32.totalorder %s134, %s148
      %p150 = scmp.eq.s32.totalorder %s26, 0
      %p151 = por %p149, %p150
      %s153 = sadd.s32 %s152, 1
      %p156 = scmp.eq.s32.totalorder %s20, 1
      %p157 = scmp.ne.s32.totalorder %s152, %s154
      %p158 = scmp.eq.s32.totalorder %s20, 0
      %p159 = por %p157, %p158
      %p160 = scmp.ne.s32.totalorder %s152, %s154
      %p161 = scmp.eq.s32.totalorder %s25, 1
      %p162 = por %p160, %p161
      %p163 = scmp.ne.s32.totalorder %s154, %s155
      %p164 = scmp.eq.s32.totalorder %s25, 0
      %p165 = por %p163, %p164
      %p166 = scmp.ne.s32.totalorder %s154, %s155
      %p167 = scmp.eq.s32.totalorder %s26, 1
      %p168 = por %p166, %p167
      %p170 = scmp.ne.s32.totalorder %s155, %s169
      %p171 = scmp.eq.s32.totalorder %s26, 0
      %p172 = por %p170, %p171
      %s173 = ssub.s32 %s27, %s39
      %s174 = ssub.s32 %s28, %s35
      %s175 = sor.u32 %s173, %s174
      %p176 = scmp.eq.s32.totalorder %s175, 0
      %s178 = sadd.s32 %s177, 1
      %s179 = scalar_select %p176, %s177, %s178
      %p182 = pneg %p176
      %p183 = scmp.eq.s32.totalorder %s20, 1
      %p184 = por %p182, %p183
      %p185 = scmp.ne.s32.totalorder %s177, %s180
      %p186 = scmp.eq.s32.totalorder %s20, 0
      %p187 = por %p185, %p186
      %p188 = scmp.ne.s32.totalorder %s177, %s180
      %p189 = scmp.eq.s32.totalorder %s25, 1
      %p190 = por %p188, %p189
      %p191 = scmp.ne.s32.totalorder %s180, %s181
      %p192 = scmp.eq.s32.totalorder %s25, 0
      %p193 = por %p191, %p192
      %p194 = scmp.ne.s32.totalorder %s180, %s181
      %p195 = scmp.eq.s32.totalorder %s26, 1
      %p196 = por %p194, %p195
      %p198 = scmp.ne.s32.totalorder %s181, %s197
      %p199 = scmp.eq.s32.totalorder %s26, 0
      %p200 = por %p198, %p199
      %s201 = ssub.s32 %s27, %s39
      %s202 = ssub.s32 %s28, %s35
      %s203 = sor.u32 %s201, %s202
      %p204 = scmp.eq.s32.totalorder %s203, 0
      %s206 = sadd.s32 %s205, 1
      %s207 = scalar_select %p204, %s205, %s206
      %p210 = pneg %p204
      %p211 = scmp.eq.s32.totalorder %s20, 1
      %p212 = por %p210, %p211
      %p213 = scmp.ne.s32.totalorder %s205, %s208
      %p214 = scmp.eq.s32.totalorder %s20, 0
      %p215 = por %p213, %p214
      %p216 = scmp.ne.s32.totalorder %s205, %s208
      %p217 = scmp.eq.s32.totalorder %s25, 1
      %p218 = por %p216, %p217
      %p219 = scmp.ne.s32.totalorder %s208, %s209
      %p220 = scmp.eq.s32.totalorder %s25, 0
      %p221 = por %p219, %p220
      %p222 = scmp.ne.s32.totalorder %s208, %s209
      %p223 = scmp.eq.s32.totalorder %s26, 1
      %p224 = por %p222, %p223
      %p226 = scmp.ne.s32.totalorder %s209, %s225
      %p227 = scmp.eq.s32.totalorder %s26, 0
      %p228 = por %p226, %p227
      %p229 = scmp.le.s32.totalorder 1, %s20
      %p230 = scmp.lt.s32.totalorder %s20, 3
      %p231 = pnand %p229, %p230
      %p232 = pneg %p231
      // Predicated region
      $region9: #{tpu_custom_call.1} parent=5 // pred_check
        _
      $region10: #{tpu_custom_call.1} parent=5 // pred_check_branch
        %234 = sbr.rel (%p231) target = $region12
      $region11: #{tpu_custom_call.1} parent=5 // pred_region
        %s235 = ssub.s32 %s20, 1
        // Predicated region
        $region13: #{tpu_custom_call.1} parent=11 // pred_check
          %p236 = pneg %p81
        $region14: #{tpu_custom_call.1} parent=11 // pred_check_branch
          %238 = sbr.rel (%p236) target = $region16
        $region15: #{tpu_custom_call.1} parent=11 // pred_region
          _
        $region16: #{tpu_custom_call.1} parent=11 // pred_fallthru
          _
        // Predicated region
        $region17: #{tpu_custom_call.1} parent=11 // pred_check
          %p239 = pneg %p102
        $region18: #{tpu_custom_call.1} parent=11 // pred_check_branch
          %241 = sbr.rel (%p239) target = $region20
        $region19: #{tpu_custom_call.1} parent=11 // pred_region
          _
        $region20: #{tpu_custom_call.1} parent=11 // pred_fallthru
          _
        // Predicated region
        $region21: #{tpu_custom_call.1} parent=11 // pred_check
          %p242 = pneg %p123
        $region22: #{tpu_custom_call.1} parent=11 // pred_check_branch
          %244 = sbr.rel (%p242) target = $region24
        $region23: #{tpu_custom_call.1} parent=11 // pred_region
          _
        $region24: #{tpu_custom_call.1} parent=11 // pred_fallthru
          _
        // Predicated region
        $region25: #{tpu_custom_call.1} parent=11 // pred_check
          %p245 = pneg %p144
        $region26: #{tpu_custom_call.1} parent=11 // pred_check_branch
          %247 = sbr.rel (%p245) target = $region28
        $region27: #{tpu_custom_call.1} parent=11 // pred_region
          _
        $region28: #{tpu_custom_call.1} parent=11 // pred_fallthru
          _
        // Predicated region
        $region29: #{tpu_custom_call.1} parent=11 // pred_check
          %p248 = pneg %p165
        $region30: #{tpu_custom_call.1} parent=11 // pred_check_branch
          %250 = sbr.rel (%p248) target = $region32
        $region31: #{tpu_custom_call.1} parent=11 // pred_region
          _
        $region32: #{tpu_custom_call.1} parent=11 // pred_fallthru
          _
      $region12: #{tpu_custom_call.1} parent=5 // pred_fallthru
        _
      %p251 = scmp.lt.s32.totalorder %s20, 2
      // Predicated region
      $region33: #{tpu_custom_call.1} parent=5 // pred_check
        %p252 = pneg %p251
      $region34: #{tpu_custom_call.1} parent=5 // pred_check_branch
        %254 = sbr.rel (%p252) target = $region36
      $region35: #{tpu_custom_call.1} parent=5 // pred_region
        // Predicated region
        $region37: #{tpu_custom_call.1} parent=35 // pred_check
          %p255 = pneg %p54
        $region38: #{tpu_custom_call.1} parent=35 // pred_check_branch
          %257 = sbr.rel (%p255) target = $region40
        $region39: #{tpu_custom_call.1} parent=35 // pred_region
          %s258 = smul.u32 2, %s28
          %p259 = scmp.lt.s32.totalorder %s27, 1
          %s260 = scalar_select %p259, %s27, 1
          %p261 = scmp.lt.s32.totalorder %s258, 1
          %s262 = scalar_select %p261, %s258, 1
          %s263 = smul.addr %s260, 6
          %s264 = sadd.s32 %s262, %s263
          %s265 = smul.addr %s264, 4
          %s266 = scalar_lea.vmem %s0, %s265
          %s267 = smul.u32 2, %s28
        $region40: #{tpu_custom_call.1} parent=35 // pred_fallthru
          _
      $region36: #{tpu_custom_call.1} parent=5 // pred_fallthru
        _
      %p268 = scmp.le.s32.totalorder 1, %s20
      %p269 = scmp.lt.s32.totalorder %s20, 3
      %p270 = pnand %p268, %p269
      %p271 = pneg %p270
      // Predicated region
      $region41: #{tpu_custom_call.1} parent=5 // pred_check
        _
      $region42: #{tpu_custom_call.1} parent=5 // pred_check_branch
        %273 = sbr.rel (%p270) target = $region44
      $region43: #{tpu_custom_call.1} parent=5 // pred_region
        %s274 = ssub.s32 %s20, 1
        %s275 = smul.u32 2, %s30
        %p276 = scmp.lt.s32.totalorder %s29, 1
        %s277 = scalar_select %p276, %s29, 1
        %p278 = scmp.lt.s32.totalorder %s275, 1
        %s279 = scalar_select %p278, %s275, 1
        %s280 = smul.addr %s277, 6
        %s281 = sadd.s32 %s279, %s280
        %s282 = smul.addr %s281, 4
        %s283 = scalar_lea.vmem %s0, %s282
        %p284 = pneg %p60
        %p285 = pneg %p57
        %p286 = pneg %p81
        %p287 = pneg %p78
        %p288 = pneg %p102
        %p289 = pneg %p99
        %p290 = pneg %p123
        %p291 = pneg %p120
        %p292 = pneg %p144
        %p293 = pneg %p141
        %p294 = pneg %p165
        %p295 = pneg %p162
        %p296 = pneg %p193
        %p297 = pneg %p190
        %s298 = sand.u32 %s180, 1
        %s299 = scalar_lea.sflag [#allocation3], %s298
        %s300 = sand.u32 %s180, 1
        %s301 = smul.addr %s300, 48
        %s302 = scalar_lea.vmem [#allocation2], %s301
        %p303 = pneg %p221
        %p304 = pneg %p218
        %s305 = sand.u32 %s208, 1
        %s306 = scalar_lea.sflag [#allocation5], %s305
        %s307 = sand.u32 %s208, 1
        %s308 = smul.addr %s307, 4
        %s309 = scalar_lea.vmem [#allocation4], %s308
        %s310 = smul.u32 2, %s30
        %p311 = scmp.lt.s32.totalorder %s29, 1
        %s312 = scalar_select %p311, %s29, 1
        %p313 = scmp.lt.s32.totalorder %s310, 1
        %s314 = scalar_select %p313, %s310, 1
        %s315 = smul.addr %s312, 6
        %s316 = sadd.s32 %s314, %s315
        %s317 = smul.addr %s316, 4
        %s318 = scalar_lea.vmem %s0, %s317
        %s319 = smul.u32 2, %s30
        %s320 = smul.u32 2, %s30
        %s321 = smul.u32 2, %s30
        %v323 = vld [vmem:[%s318] sm:$0xff]
        %v324 = vld [vmem:[%s318 + $0x8] sm:$0xff]
        %v325 = vld [vmem:[%s318 + $0x10] sm:$0xff]
        %v326 = vld [vmem:[%s5] sm:$0xff]
        %v327 = vld [vmem:[%s5 + $0x8] sm:$0xff]
        %v328 = vld [vmem:[%s5 + $0x10] sm:$0xff]
        %v329 = vld [vmem:[%s5 + $0x18] sm:$0xff]
        %v330 = vld [vmem:[%s5 + $0x20] sm:$0xff]
        %v331 = vld [vmem:[%s5 + $0x28] sm:$0xff]
        %v332 = vld [vmem:[%s5 + $0x30] sm:$0xff]
        %v333 = vld [vmem:[%s5 + $0x38] sm:$0xff]
        %v334 = vld [vmem:[%s5 + $0x40] sm:$0xff]
        %v335 = vld [vmem:[%s5 + $0x48] sm:$0xff]
        %v336 = vld [vmem:[%s5 + $0x50] sm:$0xff]
        %v337 = vld [vmem:[%s5 + $0x58] sm:$0xff]
        %v338 = vld [vmem:[%s5 + $0x60] sm:$0xff]
        %v339 = vld [vmem:[%s5 + $0x68] sm:$0xff]
        %v340 = vld [vmem:[%s5 + $0x70] sm:$0xff]
        %v341 = vld [vmem:[%s5 + $0x78] sm:$0xff]
        %v342 = vld [vmem:[%s1] sm:$0xf]
        %v343 = vld [vmem:[%s1 + $0x4] sm:$0xf]
        %v344 = vld [vmem:[%s1 + $0x8] sm:$0xf]
        %v345 = vld [vmem:[%s1 + $0xc] sm:$0xf]
        %v346 = vld [vmem:[%s1 + $0x10] sm:$0xf]
        %v347 = vld [vmem:[%s1 + $0x14] sm:$0xf]
        %v348 = vld [vmem:[%s1 + $0x18] sm:$0xf]
        %v349 = vld [vmem:[%s1 + $0x1c] sm:$0xf]
        %351 = vset.pattern.permute.xlu0 0
        %352 = vperm.xlu0 %351, %v326
        %v353 = vpop.permute.xlu0 %352
        %356 = vset.pattern.permute.xlu0 0
        %357 = vperm.xlu0 %356, %v327
        %v358 = vpop.permute.xlu0 %357
        %361 = vset.pattern.permute.xlu0 0
        %362 = vperm.xlu0 %361, %v328
        %v363 = vpop.permute.xlu0 %362
        %366 = vset.pattern.permute.xlu0 0
        %367 = vperm.xlu0 %366, %v329
        %v368 = vpop.permute.xlu0 %367
        %371 = vset.pattern.permute.xlu0 0
        %372 = vperm.xlu0 %371, %v330
        %v373 = vpop.permute.xlu0 %372
        %376 = vset.pattern.permute.xlu0 0
        %377 = vperm.xlu0 %376, %v331
        %v378 = vpop.permute.xlu0 %377
        %381 = vset.pattern.permute.xlu0 0
        %382 = vperm.xlu0 %381, %v332
        %v383 = vpop.permute.xlu0 %382
        %386 = vset.pattern.permute.xlu0 0
        %387 = vperm.xlu0 %386, %v333
        %v388 = vpop.permute.xlu0 %387
        %v398 = vunpack.c.l.b16 %v342
        %v399 = vunpack.c.l.b16 %v343
        %v400 = vunpack.c.l.b16 %v344
        %v401 = vunpack.c.l.b16 %v345
        %v402 = vunpack.c.l.b16 %v346
        %v403 = vunpack.c.l.b16 %v347
        %v404 = vunpack.c.l.b16 %v348
        %v405 = vunpack.c.l.b16 %v349
        %v406 = vpack.c.b16 %v399, %v398
        %v407 = vpack.c.b16 %v401, %v400
        %v408 = vpack.c.b16 %v403, %v402
        %v409 = vpack.c.b16 %v405, %v404
        %v413 = vunpack.c.l.b16 %v323
        %v414 = vunpack.c.h.b16 %v323
        %v415 = vunpack.c.l.b16 %v324
        %v416 = vunpack.c.h.b16 %v324
        %v417 = vunpack.c.l.b16 %v325
        %v418 = vunpack.c.h.b16 %v325
        %v419 = vpack.c.b16 %v415, %v413
        %v420 = vpack.c.b16 %v416, %v414
        %v421 = vpack.c.b16 %v417, %v417
        %v422 = vpack.c.b16 %v418, %v418
        %vm425 = vcmask 195584
        %v427 = vsel %vm425, %v406, 0
        %v430 = vsel %vm425, %v407, 0
        %v433 = vsel %vm425, %v408, 0
        %v436 = vsel %vm425, %v409, 0
        %vm438 = vcmask 1043456
        %v440 = vsel %vm438, %v421, 0
        %v443 = vsel %vm438, %v422, 0
        %445 = vmatprep.subr.bf16.mxu0 0
        %446 = vmatpush1.bf16.msra.mxu0 0
        %447 = vmatprep.subr.bf16.mxu0 0
        %448 = vmatpush1.bf16.msra.mxu0 0
        %449 = vmatprep.subr.bf16.mxu0 0
        %450 = vmatpush1.bf16.msra.mxu0 0
        %451 = vmatprep.subr.bf16.mxu0 0
        %452 = vmatpush1.bf16.msra.mxu0 0
        %453 = vmatprep.subr.bf16.mxu0 0
        %454 = vmatpush1.bf16.msra.mxu0 0
        %455 = vmatprep.subr.bf16.mxu0 0
        %456 = vmatpush1.bf16.msra.mxu0 0
        %457 = vmatprep.subr.bf16.mxu0 %v443
        %458 = vmatpush1.bf16.msra.mxu0 %v440
        %459 = vmatprep.subr.bf16.mxu0 %v420
        %460 = vmatpush1.bf16.msra.mxu0 %v419
        %461 = vmatprep.subr.bf16.mxu0 0
        %462 = vmatpush2.bf16.msra.mxu0 0
        %463 = vmatprep.subr.bf16.mxu0 0
        %464 = vmatpush2.bf16.msra.mxu0 0
        %465 = vmatprep.subr.bf16.mxu0 0
        %466 = vmatpush2.bf16.msra.mxu0 0
        %467 = vmatprep.subr.bf16.mxu0 0
        %468 = vmatpush2.bf16.msra.mxu0 0
        %469 = vmatprep.subr.bf16.mxu0 0
        %470 = vmatpush2.bf16.msra.mxu0 0
        %471 = vmatprep.subr.bf16.mxu0 0
        %472 = vmatpush2.bf16.msra.mxu0 0
        %473 = vmatprep.subr.bf16.mxu0 0
        %474 = vmatpush2.bf16.msra.mxu0 0
        %475 = vmatprep.subr.bf16.mxu0 0
        %476 = vmatpush2.bf16.msra.mxu0 0
        %477 = vmatprep.mubr.bf16.mxu0 0
        %478 = vmatmul.mubr.bf16.gmra.mxu0 %v427
        %v479 = vpop.f32.mrf.mxu0
        %v480 = vadd.f32 %v353, %v479
        %v481 = vpop.f32.mrf.mxu0
        %v482 = vadd.f32 %v353, %v481
        %v483 = vpop.f32.mrf.mxu0
        %v484 = vadd.f32 %v358, %v483
        %v485 = vpop.f32.mrf.mxu0
        %v486 = vadd.f32 %v358, %v485
        %487 = vmatprep.mubr.bf16.mxu0 0
        %488 = vmatmul.mubr.bf16.gmra.mxu0 %v430
        %v489 = vpop.f32.mrf.mxu0
        %v490 = vadd.f32 %v363, %v489
        %v491 = vpop.f32.mrf.mxu0
        %v492 = vadd.f32 %v363, %v491
        %v493 = vpop.f32.mrf.mxu0
        %v494 = vadd.f32 %v368, %v493
        %v495 = vpop.f32.mrf.mxu0
        %v496 = vadd.f32 %v368, %v495
        %497 = vmatprep.mubr.bf16.mxu0 0
        %498 = vmatmul.mubr.bf16.gmra.mxu0 %v433
        %v499 = vpop.f32.mrf.mxu0
        %v500 = vadd.f32 %v373, %v499
        %v501 = vpop.f32.mrf.mxu0
        %v502 = vadd.f32 %v373, %v501
        %v503 = vpop.f32.mrf.mxu0
        %v504 = vadd.f32 %v378, %v503
        %v505 = vpop.f32.mrf.mxu0
        %v506 = vadd.f32 %v378, %v505
        %507 = vmatprep.mubr.bf16.mxu0 0
        %508 = vmatmul.mubr.bf16.gmra.mxu0 %v436
        %v509 = vpop.f32.mrf.mxu0
        %v510 = vadd.f32 %v383, %v509
        %v511 = vpop.f32.mrf.mxu0
        %v512 = vadd.f32 %v383, %v511
        %v513 = vpop.f32.mrf.mxu0
        %v514 = vadd.f32 %v388, %v513
        %v515 = vpop.f32.mrf.mxu0
        %v516 = vadd.f32 %v388, %v515
        %517 = vdwg.mxu0
        %v518 = vmax.f32 %v480, 0.0
        %v519 = vmax.f32 %v482, 0.0
        %v520 = vmax.f32 %v484, 0.0
        %v521 = vmax.f32 %v486, 0.0
        %v522 = vmax.f32 %v490, 0.0
        %v523 = vmax.f32 %v492, 0.0
        %v524 = vmax.f32 %v494, 0.0
        %v525 = vmax.f32 %v496, 0.0
        %v526 = vmax.f32 %v500, 0.0
        %v527 = vmax.f32 %v502, 0.0
        %v528 = vmax.f32 %v504, 0.0
        %v529 = vmax.f32 %v506, 0.0
        %v530 = vmax.f32 %v510, 0.0
        %v531 = vmax.f32 %v512, 0.0
        %v532 = vmax.f32 %v514, 0.0
        %v533 = vmax.f32 %v516, 0.0
        %v534 = vld [vmem:[%s2] sm:$0xf]
        %v535 = vld [vmem:[%s2 + $0x4] sm:$0xf]
        %v536 = vld [vmem:[%s2 + $0x8] sm:$0xf]
        %v537 = vpack.c.bf16 %v520, %v518
        %v538 = vpack.c.bf16 %v521, %v519
        %v539 = vpack.c.bf16 %v524, %v522
        %v540 = vpack.c.bf16 %v525, %v523
        %v541 = vpack.c.bf16 %v528, %v526
        %v542 = vpack.c.bf16 %v529, %v527
        %v543 = vpack.c.bf16 %v532, %v530
        %v544 = vpack.c.bf16 %v533, %v531
        %546 = vset.pattern.permute.xlu0 0
        %547 = vperm.xlu0 %546, %v334
        %v548 = vpop.permute.xlu0 %547
        %551 = vset.pattern.permute.xlu0 0
        %552 = vperm.xlu0 %551, %v335
        %v553 = vpop.permute.xlu0 %552
        %556 = vset.pattern.permute.xlu0 0
        %557 = vperm.xlu0 %556, %v336
        %v558 = vpop.permute.xlu0 %557
        %v563 = vunpack.c.l.b16 %v534
        %v564 = vunpack.c.l.b16 %v535
        %v565 = vunpack.c.l.b16 %v536
        %v566 = vpack.c.b16 %v564, %v563
        %v567 = vpack.c.b16 %v565, %v565
        %vm568 = vcmask 523264
        %v570 = vsel %vm568, %v566, 0
        %v573 = vsel %vm568, %v567, 0
        %575 = vmatprep.subr.bf16.mxu0 0
        %576 = vmatpush1.bf16.msra.mxu0 0
        %577 = vmatprep.subr.bf16.mxu0 0
        %578 = vmatpush1.bf16.msra.mxu0 0
        %579 = vmatprep.subr.bf16.mxu0 0
        %580 = vmatpush1.bf16.msra.mxu0 0
        %581 = vmatprep.subr.bf16.mxu0 0
        %582 = vmatpush1.bf16.msra.mxu0 0
        %583 = vmatprep.subr.bf16.mxu0 %v544
        %584 = vmatpush1.bf16.msra.mxu0 %v543
        %585 = vmatprep.subr.bf16.mxu0 %v542
        %586 = vmatpush1.bf16.msra.mxu0 %v541
        %587 = vmatprep.subr.bf16.mxu0 %v540
        %588 = vmatpush1.bf16.msra.mxu0 %v539
        %589 = vmatprep.subr.bf16.mxu0 %v538
        %590 = vmatpush1.bf16.msra.mxu0 %v537
        %591 = vmatprep.subr.bf16.mxu0 0
        %592 = vmatpush2.bf16.msra.mxu0 0
        %593 = vmatprep.subr.bf16.mxu0 0
        %594 = vmatpush2.bf16.msra.mxu0 0
        %595 = vmatprep.subr.bf16.mxu0 0
        %596 = vmatpush2.bf16.msra.mxu0 0
        %597 = vmatprep.subr.bf16.mxu0 0
        %598 = vmatpush2.bf16.msra.mxu0 0
        %599 = vmatprep.subr.bf16.mxu0 0
        %600 = vmatpush2.bf16.msra.mxu0 0
        %601 = vmatprep.subr.bf16.mxu0 0
        %602 = vmatpush2.bf16.msra.mxu0 0
        %603 = vmatprep.subr.bf16.mxu0 0
        %604 = vmatpush2.bf16.msra.mxu0 0
        %605 = vmatprep.subr.bf16.mxu0 0
        %606 = vmatpush2.bf16.msra.mxu0 0
        %607 = vmatprep.mubr.bf16.mxu0 0
        %608 = vmatmul.mubr.bf16.gmra.mxu0 %v570
        %v609 = vpop.f32.mrf.mxu0
        %v610 = vadd.f32 %v548, %v609
        %v611 = vpop.f32.mrf.mxu0
        %v612 = vadd.f32 %v548, %v611
        %v613 = vpop.f32.mrf.mxu0
        %v614 = vadd.f32 %v553, %v613
        %v615 = vpop.f32.mrf.mxu0
        %v616 = vadd.f32 %v553, %v615
        %617 = vmatprep.mubr.bf16.mxu0 0
        %618 = vmatmul.mubr.bf16.gmra.mxu0 %v573
        %v619 = vpop.f32.mrf.mxu0
        %v620 = vadd.f32 %v558, %v619
        %v621 = vpop.f32.mrf.mxu0
        %v622 = vadd.f32 %v558, %v621
        %v623 = vpop.f32.mrf.mxu0
        %v624 = vpop.f32.mrf.mxu0
        %625 = vdwg.mxu0
        %v626 = vld [vmem:[%s3] sm:$0xf]
        %v627 = vld [vmem:[%s3 + $0x4] sm:$0xf]
        %v628 = vld [vmem:[%s3 + $0x8] sm:$0xf]
        %v629 = vld [vmem:[%s3 + $0xc] sm:$0xf]
        %v630 = vpack.c.bf16 %v610, %v610
        %v631 = vpack.c.bf16 %v612, %v612
        %633 = vset.pattern.permute.xlu0 0
        %634 = vperm.xlu0 %633, %v337
        %v635 = vpop.permute.xlu0 %634
        %638 = vset.pattern.permute.xlu0 0
        %639 = vperm.xlu0 %638, %v338
        %v640 = vpop.permute.xlu0 %639
        %643 = vset.pattern.permute.xlu0 0
        %644 = vperm.xlu0 %643, %v339
        %v645 = vpop.permute.xlu0 %644
        %648 = vset.pattern.permute.xlu0 0
        %649 = vperm.xlu0 %648, %v340
        %v650 = vpop.permute.xlu0 %649
        %v656 = vunpack.c.l.b16 %v626
        %v657 = vunpack.c.l.b16 %v627
        %v658 = vunpack.c.l.b16 %v628
        %v659 = vunpack.c.l.b16 %v629
        %v660 = vpack.c.b16 %v657, %v656
        %v661 = vpack.c.b16 %v659, %v658
        %vm662 = vcmask 64512
        %v664 = vsel %vm662, %v660, 0
        %v667 = vsel %vm662, %v661, 0
        %v670 = vsel %vm438, %v630, 0
        %v673 = vsel %vm438, %v631, 0
        %675 = vmatprep.subr.bf16.mxu0 0
        %676 = vmatpush1.bf16.msra.mxu0 0
        %677 = vmatprep.subr.bf16.mxu0 0
        %678 = vmatpush1.bf16.msra.mxu0 0
        %679 = vmatprep.subr.bf16.mxu0 0
        %680 = vmatpush1.bf16.msra.mxu0 0
        %681 = vmatprep.subr.bf16.mxu0 0
        %682 = vmatpush1.bf16.msra.mxu0 0
        %683 = vmatprep.subr.bf16.mxu0 0
        %684 = vmatpush1.bf16.msra.mxu0 0
        %685 = vmatprep.subr.bf16.mxu0 0
        %686 = vmatpush1.bf16.msra.mxu0 0
        %687 = vmatprep.subr.bf16.mxu0 0
        %688 = vmatpush1.bf16.msra.mxu0 0
        %689 = vmatprep.subr.bf16.mxu0 %v673
        %690 = vmatpush1.bf16.msra.mxu0 %v670
        %691 = vmatprep.subr.bf16.mxu0 0
        %692 = vmatpush2.bf16.msra.mxu0 0
        %693 = vmatprep.subr.bf16.mxu0 0
        %694 = vmatpush2.bf16.msra.mxu0 0
        %695 = vmatprep.subr.bf16.mxu0 0
        %696 = vmatpush2.bf16.msra.mxu0 0
        %697 = vmatprep.subr.bf16.mxu0 0
        %698 = vmatpush2.bf16.msra.mxu0 0
        %699 = vmatprep.subr.bf16.mxu0 0
        %700 = vmatpush2.bf16.msra.mxu0 0
        %701 = vmatprep.subr.bf16.mxu0 0
        %702 = vmatpush2.bf16.msra.mxu0 0
        %703 = vmatprep.subr.bf16.mxu0 0
        %704 = vmatpush2.bf16.msra.mxu0 0
        %705 = vmatprep.subr.bf16.mxu0 0
        %706 = vmatpush2.bf16.msra.mxu0 0
        %707 = vmatprep.mubr.bf16.mxu0 0
        %708 = vmatmul.mubr.bf16.gmra.mxu0 %v664
        %v709 = vpop.f32.mrf.mxu0
        %v710 = vadd.f32 %v635, %v709
        %v711 = vpop.f32.mrf.mxu0
        %v712 = vadd.f32 %v635, %v711
        %v713 = vpop.f32.mrf.mxu0
        %v714 = vadd.f32 %v640, %v713
        %v715 = vpop.f32.mrf.mxu0
        %v716 = vadd.f32 %v640, %v715
        %717 = vmatprep.mubr.bf16.mxu0 0
        %718 = vmatmul.mubr.bf16.gmra.mxu0 %v667
        %v719 = vpop.f32.mrf.mxu0
        %v720 = vadd.f32 %v645, %v719
        %v721 = vpop.f32.mrf.mxu0
        %v722 = vadd.f32 %v645, %v721
        %v723 = vpop.f32.mrf.mxu0
        %v724 = vadd.f32 %v650, %v723
        %v725 = vpop.f32.mrf.mxu0
        %v726 = vadd.f32 %v650, %v725
        %727 = vdwg.mxu0
        %v728 = vmax.f32 %v710, 0.0
        %v729 = vmax.f32 %v712, 0.0
        %v730 = vmax.f32 %v714, 0.0
        %v731 = vmax.f32 %v716, 0.0
        %v732 = vmax.f32 %v720, 0.0
        %v733 = vmax.f32 %v722, 0.0
        %v734 = vmax.f32 %v724, 0.0
        %v735 = vmax.f32 %v726, 0.0
        %v736 = vld [vmem:[%s4] sm:$0x1]
        %v737 = vpack.c.bf16 %v730, %v728
        %v738 = vpack.c.bf16 %v731, %v729
        %v739 = vpack.c.bf16 %v734, %v732
        %v740 = vpack.c.bf16 %v735, %v733
        %742 = vset.pattern.permute.xlu0 0
        %743 = vperm.xlu0 %742, %v341
        %v744 = vpop.permute.xlu0 %743
        %vm746 = vcmask 261120
        %v748 = vsel %vm746, %v736, 0
        %750 = vmatprep.subr.bf16.mxu0 0
        %751 = vmatpush1.bf16.msra.mxu0 0
        %752 = vmatprep.subr.bf16.mxu0 0
        %753 = vmatpush1.bf16.msra.mxu0 0
        %754 = vmatprep.subr.bf16.mxu0 0
        %755 = vmatpush1.bf16.msra.mxu0 0
        %756 = vmatprep.subr.bf16.mxu0 0
        %757 = vmatpush1.bf16.msra.mxu0 0
        %758 = vmatprep.subr.bf16.mxu0 0
        %759 = vmatpush1.bf16.msra.mxu0 0
        %760 = vmatprep.subr.bf16.mxu0 0
        %761 = vmatpush1.bf16.msra.mxu0 0
        %762 = vmatprep.subr.bf16.mxu0 %v740
        %763 = vmatpush1.bf16.msra.mxu0 %v739
        %764 = vmatprep.subr.bf16.mxu0 %v738
        %765 = vmatpush1.bf16.msra.mxu0 %v737
        %766 = vmatprep.subr.bf16.mxu0 0
        %767 = vmatpush2.bf16.msra.mxu0 0
        %768 = vmatprep.subr.bf16.mxu0 0
        %769 = vmatpush2.bf16.msra.mxu0 0
        %770 = vmatprep.subr.bf16.mxu0 0
        %771 = vmatpush2.bf16.msra.mxu0 0
        %772 = vmatprep.subr.bf16.mxu0 0
        %773 = vmatpush2.bf16.msra.mxu0 0
        %774 = vmatprep.subr.bf16.mxu0 0
        %775 = vmatpush2.bf16.msra.mxu0 0
        %776 = vmatprep.subr.bf16.mxu0 0
        %777 = vmatpush2.bf16.msra.mxu0 0
        %778 = vmatprep.subr.bf16.mxu0 0
        %779 = vmatpush2.bf16.msra.mxu0 0
        %780 = vmatprep.subr.bf16.mxu0 0
        %781 = vmatpush2.bf16.msra.mxu0 0
        %782 = vmatprep.mubr.bf16.mxu0 0
        %783 = vmatmul.mubr.bf16.gmra.mxu0 %v748
        %v784 = vpop.f32.mrf.mxu0
        %v785 = vadd.f32 %v744, %v784
        %v786 = vpop.f32.mrf.mxu0
        %v787 = vadd.f32 %v744, %v786
        %v788 = vpop.f32.mrf.mxu0
        %v789 = vpop.f32.mrf.mxu0
        %790 = vdwg.mxu0
        %v793 = vrot.slane %v785, 1
        %v794 = vrot.slane %v787, 1
        %v797 = vmax.f32 %v785, %v793
        %v798 = vmax.f32 %v787, %v794
        %v799 = vsub.f32 %v785, %v797
        %v800 = vsub.f32 %v787, %v798
        %v801 = vmul.f32 %v799, 1.442695
        %v802 = vpow.pop %v801
        %v803 = vmul.f32 %v800, 1.442695
        %v804 = vpow.pop %v803
        %v807 = vrot.slane %v797, 7
        %v808 = vrot.slane %v798, 7
        %v811 = vsub.f32 %v785, %v807
        %v812 = vsub.f32 %v787, %v808
        %v813 = vmul.f32 %v811, 1.442695
        %v814 = vpow.pop %v813
        %v815 = vmul.f32 %v812, 1.442695
        %v816 = vpow.pop %v815
        %v819 = vrot.slane %v814, 1
        %v820 = vrot.slane %v816, 1
        %v823 = vadd.f32 %v802, %v819
        %v824 = vadd.f32 %v804, %v820
        %v825 = vrcp.pop %v823
        %v826 = vrcp.pop %v824
        %827 = vst [vmem:[%s302] sm:$0xff] %v610
        %828 = vst [vmem:[%s302 + $0x8] sm:$0xff] %v612
        %829 = vst [vmem:[%s302 + $0x10] sm:$0xff] %v614
        %830 = vst [vmem:[%s302 + $0x18] sm:$0xff] %v616
        %831 = vst [vmem:[%s302 + $0x20] sm:$0xff] %v620
        %832 = vst [vmem:[%s302 + $0x28] sm:$0xff] %v622
        %v833 = vmul.f32 %v802, %v825
        %v834 = vmul.f32 %v804, %v826
        %v837 = vrot.slane %v825, 7
        %v838 = vrot.slane %v826, 7
        %v841 = vmul.f32 %v814, %v837
        %v842 = vmul.f32 %v816, %v838
        %vm843 = vcmask 1040384
        %v844 = vsel %vm843, %v833, %v841
        %v845 = vsel %vm843, %v834, %v842
        %v848 = vcombine.low %v844, %v845
        %v850 = vunpack.c.l.s4 1983009808
        %v851 = vunpack.c.0.s8 %v850
        %v852 = vlaneseq
        %v853 = vshrl.u32 %v852, 7
        %v854 = vsub.s32 %v851, %v853
        %v855 = vrot.slane %v848, %v854
        %857 = vst [vmem:[%s309] sm:$0xf] %v855
        %s858 = sand.u32 %s180, 1
        %s859 = scalar_lea.sflag [#allocation3], %s858
        %s860 = sand.u32 %s180, 1
        %s861 = smul.addr %s860, 48
        %s862 = scalar_lea.vmem [#allocation2], %s861
        %s863 = sand.u32 %s208, 1
        %s864 = scalar_lea.sflag [#allocation5], %s863
        %s865 = sand.u32 %s208, 1
        %s866 = smul.addr %s865, 4
        %s867 = scalar_lea.vmem [#allocation4], %s866
        // Predicated region
        $region45: #{tpu_custom_call.1} parent=43 // pred_check
          %p868 = pneg %p190
        $region46: #{tpu_custom_call.1} parent=43 // pred_check_branch
          %870 = sbr.rel (%p868) target = $region48
        $region47: #{tpu_custom_call.1} parent=43 // pred_region
          %s871 = smul.u32 2, %s30
          %s873 = ssub.s32 768, 768
          %874 = vsyncadd %s859, %s873
          %s875 = smul.addr %s29, 6
          %s876 = sadd.s32 %s871, %s875
          %s877 = smul.addr %s876, 128
          %s878 = scalar_lea.hbm %s6, %s877
          %s879 = sshll.u32 %s862, 4
          %s880 = int_to_ptr.vmem [resolvable:$true] %s879
          %885 = dma.vmem_to_hbm [thread:$0]  %s880, 768, %s878, %s859, 256, 256, 16
        $region48: #{tpu_custom_call.1} parent=43 // pred_fallthru
          _
        // Predicated region
        $region49: #{tpu_custom_call.1} parent=43 // pred_check
          %p886 = pneg %p218
        $region50: #{tpu_custom_call.1} parent=43 // pred_check_branch
          %888 = sbr.rel (%p886) target = $region52
        $region51: #{tpu_custom_call.1} parent=43 // pred_region
          %s889 = smul.u32 2, %s30
          %s891 = ssub.s32 64, 64
          %892 = vsyncadd %s864, %s891
          %s893 = smul.addr %s29, 2
          %s894 = sadd.s32 %s889, %s893
          %s895 = smul.addr %s894, 32
          %s896 = scalar_lea.hbm %s7, %s895
          %s898 = sshll.u32 %s867, 4
          %s899 = int_to_ptr.vmem [resolvable:$true] %s898
          %901 = dma.vmem_to_hbm [thread:$0]  %s899, 64, %s896, %s864
        $region52: #{tpu_custom_call.1} parent=43 // pred_fallthru
          _
      $region44: #{tpu_custom_call.1} parent=5 // pred_fallthru
        _
      %p902 = scmp.le.s32.totalorder 2, %s20
      // Predicated region
      $region53: #{tpu_custom_call.1} parent=5 // pred_check
        %p903 = pneg %p902
      $region54: #{tpu_custom_call.1} parent=5 // pred_check_branch
        %905 = sbr.rel (%p903) target = $region56
      $region55: #{tpu_custom_call.1} parent=5 // pred_region
        %s906 = ssub.s32 %s20, 2
        // Predicated region
        $region57: #{tpu_custom_call.1} parent=55 // pred_check
          %p907 = pneg %p196
        $region58: #{tpu_custom_call.1} parent=55 // pred_check_branch
          %909 = sbr.rel (%p907) target = $region60
        $region59: #{tpu_custom_call.1} parent=55 // pred_region
          %s910 = sand.u32 %s181, 1
          %s911 = scalar_lea.sflag [#allocation3], %s910
          %s912 = sand.u32 %s181, 1
          %s913 = smul.addr %s912, 48
          %s914 = scalar_lea.vmem [#allocation2], %s913
          %915 = dma.done %s911, 768
        $region60: #{tpu_custom_call.1} parent=55 // pred_fallthru
          _
        // Predicated region
        $region61: #{tpu_custom_call.1} parent=55 // pred_check
          %p916 = pneg %p224
        $region62: #{tpu_custom_call.1} parent=55 // pred_check_branch
          %918 = sbr.rel (%p916) target = $region64
        $region63: #{tpu_custom_call.1} parent=55 // pred_region
          %s919 = sand.u32 %s209, 1
          %s920 = scalar_lea.sflag [#allocation5], %s919
          %s921 = sand.u32 %s209, 1
          %s922 = smul.addr %s921, 4
          %s923 = scalar_lea.vmem [#allocation4], %s922
          %924 = dma.done %s920, 64
        $region64: #{tpu_custom_call.1} parent=55 // pred_fallthru
          _
      $region56: #{tpu_custom_call.1} parent=5 // pred_fallthru
        _
    $region6: #{tpu_custom_call.1} parent=1 // loop_footer
      %s24 = sadd.s32 1, %s20
    $region7: #{tpu_custom_call.1} parent=1 // loop_footer_branch
      %19 = sbr.rel target = $region3
    $region8: #{tpu_custom_call.1} parent=1 // loop_exit
      _
    %925 = vsyncpa [#allocation3], 1
    %s926 = scalar_lea.sflag [#allocation3], 1
    %927 = vsyncpa %s926, 1
    %928 = vsyncpa [#allocation5], 1
    %s929 = scalar_lea.sflag [#allocation5], 1
    %930 = vsyncpa %s929, 1

</llo_original>
